<compile_context>
chip_gen: v7x
topology: tpu7x:2x2x1
jax: 0.10.0
libtpu: 0.0.40
codegen_flags: <defaults>
</compile_context>

<pallas_src>
import math

import jax
import jax.numpy as jnp
from jax.experimental import pallas as pl
from jax.experimental.pallas import tpu as pltpu


def _make_hbm_copy_kernel(chunk_starts, chunk_sizes):
    """Build a kernel copying src->dst HBM via statically chunked async DMAs."""
    n_chunks = len(chunk_starts)

    def kernel(x_hbm, o_hbm, sems):
        copies = []
        # Static unroll: issue all chunk DMAs back-to-back so several are in
        # flight on the DMA engines, then wait for all of them.
        for c in range(n_chunks):
            cp = pltpu.make_async_copy(
                x_hbm.at[pl.ds(chunk_starts[c], chunk_sizes[c])],
                o_hbm.at[pl.ds(chunk_starts[c], chunk_sizes[c])],
                sems.at[c],
            )
            cp.start()
            copies.append(cp)
        for cp in copies:
            cp.wait()

    return kernel


def identity_adapter(
    x: jax.Array,
    *,
    materialize_copy: bool = False,
    max_outstanding_dmas: int = 8,
    target_chunk_bytes: int = 8 << 20,
) -> jax.Array:
    """Identity forward pass.

    By default this is a true identity (returns x with no HBM traffic).
    With materialize_copy=True it produces a fresh buffer via a Pallas
    HBM->HBM DMA copy kernel (useful when a distinct output buffer is
    required, and what the demo uses to exercise the kernel).
    """
    if not materialize_copy:
        # Fast path: semantically `forward(x) -> x`; no kernel, no copy.
        return x

    orig_shape = x.shape
    n = math.prod(orig_shape) if orig_shape else 1
    if n == 0:
        return x  # nothing to copy

    itemsize = jnp.dtype(x.dtype).itemsize

    # View used only to build DMA descriptors (no vreg layout implications):
    # lane-dense 2D (cols multiple of 128) when it divides evenly, else the
    # flat contiguous 1D buffer.
    if n % 128 == 0:
        groups = n // 128
        k = min(4096 // 128, groups)
        while groups % k:
            k -= 1
        cols = 128 * k
        view_shape = (n // cols, cols)
    else:
        view_shape = (n,)

    xv = x.reshape(view_shape)
    leading = view_shape[0]
    row_bytes = (n // leading) * itemsize

    # Split the leading dim into up to `max_outstanding_dmas` chunks of
    # roughly `target_chunk_bytes` each (static sizes, unrolled in-kernel).
    rows_per_chunk = max(1, target_chunk_bytes // max(1, row_bytes))
    n_chunks = max(1, min(max_outstanding_dmas, pl.cdiv(leading, rows_per_chunk)))
    base, rem = divmod(leading, n_chunks)
    chunk_sizes = [base + (1 if c < rem else 0) for c in range(n_chunks)]
    chunk_sizes = [s for s in chunk_sizes if s > 0]
    chunk_starts = [0]
    for s in chunk_sizes[:-1]:
        chunk_starts.append(chunk_starts[-1] + s)
    n_chunks = len(chunk_sizes)

    kernel = _make_hbm_copy_kernel(tuple(chunk_starts), tuple(chunk_sizes))

    out = pl.pallas_call(
        kernel,
        out_shape=jax.ShapeDtypeStruct(view_shape, x.dtype),
        in_specs=[pl.BlockSpec(memory_space=pl.ANY)],   # raw HBM ref, no auto-DMA
        out_specs=pl.BlockSpec(memory_space=pl.ANY),    # raw HBM ref, written by DMA
        scratch_shapes=[pltpu.SemaphoreType.DMA((n_chunks,))],
        cost_estimate=pl.CostEstimate(
            flops=0, transcendentals=0, bytes_accessed=2 * n * itemsize),
    )(xv)

    return out.reshape(orig_shape)


if __name__ == "__main__":
    key = jax.random.PRNGKey(0)
    # Small NCHW-like vision feature input: batch=2, channels=4, spatial=16x16.
    x = jax.random.normal(key, (2, 4, 16, 16), dtype=jnp.float32)

    # Fast path: true identity, no kernel launch.
    y_fast = identity_adapter(x)
    assert y_fast is x

    # Materialized path: exercise the Pallas HBM->HBM DMA copy kernel once.
    y = identity_adapter(x, materialize_copy=True)
    y = jax.block_until_ready(y)

    assert y.shape == x.shape, (y.shape, x.shape)
    assert y.dtype == x.dtype, (y.dtype, x.dtype)
    assert bool(jnp.array_equal(y, x)), "identity output mismatch"

    print("KERNEL_OK")
</pallas_src>

<mosaic_0001>
module attributes {stable_mosaic.version = 11 : i64} {
  func.func @kernel(%arg0: memref<1x2048xf32, #tpu.memory_space<any>>, %arg1: memref<1x2048xf32, #tpu.memory_space<any>>, %arg2: memref<1x!tpu.dma_semaphore, #tpu.memory_space<semaphore_mem>>) attributes {dimension_semantics = [], scalar_prefetch = 0 : i64, scratch_operands = 1 : i64, tpu.core_type = #tpu.core_type<tc>} {
    %c0_i32 = arith.constant 0 : i32
    %c0_i32_0 = arith.constant 0 : i32
    %c0_i32_1 = arith.constant 0 : i32
    %0 = tpu.memref_slice %arg0[%c0_i32_0, %c0_i32_1] : memref<1x2048xf32, #tpu.memory_space<any>> -> memref<1x2048xf32, #tpu.memory_space<any>>
    %c0_i32_2 = arith.constant 0 : i32
    %c0_i32_3 = arith.constant 0 : i32
    %1 = tpu.memref_slice %arg1[%c0_i32_2, %c0_i32_3] : memref<1x2048xf32, #tpu.memory_space<any>> -> memref<1x2048xf32, #tpu.memory_space<any>>
    %2 = tpu.memref_slice %arg2[%c0_i32] : memref<1x!tpu.dma_semaphore, #tpu.memory_space<semaphore_mem>> -> memref<1x!tpu.dma_semaphore, #tpu.memory_space<semaphore_mem>>
    %3 = tpu.memref_squeeze %2 : memref<1x!tpu.dma_semaphore, #tpu.memory_space<semaphore_mem>> -> memref<!tpu.dma_semaphore, #tpu.memory_space<semaphore_mem>>
    tpu.enqueue_dma source(%0 : memref<1x2048xf32, #tpu.memory_space<any>>) target(%1 : memref<1x2048xf32, #tpu.memory_space<any>>) target_semaphore(%3 : memref<!tpu.dma_semaphore, #tpu.memory_space<semaphore_mem>>)
    %c0_i32_4 = arith.constant 0 : i32
    %c0_i32_5 = arith.constant 0 : i32
    %c0_i32_6 = arith.constant 0 : i32
    %4 = tpu.memref_slice %arg0[%c0_i32_5, %c0_i32_6] : memref<1x2048xf32, #tpu.memory_space<any>> -> memref<1x2048xf32, #tpu.memory_space<any>>
    %c0_i32_7 = arith.constant 0 : i32
    %c0_i32_8 = arith.constant 0 : i32
    %5 = tpu.memref_slice %arg1[%c0_i32_7, %c0_i32_8] : memref<1x2048xf32, #tpu.memory_space<any>> -> memref<1x2048xf32, #tpu.memory_space<any>>
    %6 = tpu.memref_slice %arg2[%c0_i32_4] : memref<1x!tpu.dma_semaphore, #tpu.memory_space<semaphore_mem>> -> memref<1x!tpu.dma_semaphore, #tpu.memory_space<semaphore_mem>>
    %7 = tpu.memref_squeeze %6 : memref<1x!tpu.dma_semaphore, #tpu.memory_space<semaphore_mem>> -> memref<!tpu.dma_semaphore, #tpu.memory_space<semaphore_mem>>
    tpu.wait_dma2 semaphore(%7 : memref<!tpu.dma_semaphore, #tpu.memory_space<semaphore_mem>>) src(%4 : memref<1x2048xf32, #tpu.memory_space<any>>) dst(%5 : memref<1x2048xf32, #tpu.memory_space<any>>)
    return
  }
}

</mosaic_0001>

<llo_original>
// kernel: tpu_custom_call.1
$region0: #{tpu_custom_call.1}
  #allocation0 [shape = 'u32[]', space=smem, size = 0x4, offset = 0x4, fixed_abs, tag = 'smem constant byte address 0x4 - core index']
  #allocation1 [shape = 'u32[144,128]{1,0:T(1,128)}', space=vmem, size = 0x12000, scoped, tag = 'internal scratch']
  #allocation2 [shape = 's32[1]{0}', space=sflag, size = 0x4, scoped, tag = 'scratch operand']
  #allocation3 [shape = 's32[]', space=sflag, size = 0x4, offset = 0, fixed_abs, tag = 'sflag constant byte address 0x0 - dummy sync flag']
  #allocation4 [shape = 'u32[0]{0}', space=smem, size = 0, offset = 0, fixed_abs, tag = 'smem constant byte address 0x0 - null']
  %s0 = inlined_call_operand.hbm [shape: f32[1,2048], index: 0, kind: input, shape index: {}]
  %s1 = inlined_call_operand.hbm [shape: f32[1,2048], index: 1, kind: output, shape index: {}]
  %s2 = sld [smem:[#allocation0]]
  $region2: #{tpu_custom_call.1} parent=0
    _
  %s4 = ssub.s32 1, %s2
  %s5 = scalar_select 0, %s4, %s2
  %s7 = sshll.u32 1, 14
  %s8 = sxor.u32 4294967295, %s7
  %s11 = sshll.u32 3, 24
  %s12 = sxor.u32 4294967295, %s11
  %s13 = sand.u32 0, %s12
  %s15 = sor.u32 %s13, 0
  %18 = dma.general %s0, 256, %s1, [#allocation2], [#allocation3], [#allocation4], %s15, 0
  %s19 = smul.u32 1, 16
  %s20 = sshll.u32 %s19, 4
  %21 = dma.done [#allocation2], %s20
  %22 = vsyncmov [#allocation2]
  %s23 = vpop.sfrf %22
  %p24 = scmp.eq.s32.totalorder %s23, 0
  %p25 = pneg %p24
  %27 = shalt.err (%p25)

</llo_original>
